<compile_context>
chip_gen: v7x
topology: tpu7x:2x2x1
jax: 0.10.0
libtpu: 0.0.40
codegen_flags: <defaults>
</compile_context>

<pallas_src>
import functools

import jax
import jax.numpy as jnp
from jax.experimental import pallas as pl
from jax.experimental.pallas import tpu as pltpu


# ----------------------------- Pallas kernel --------------------------------
def _biased_tanh_kernel(x_ref, o_ref, *, mult, bias):
    # Elementwise: tanh goes to the EUP, the scale/shift are VPU ops.
    x = x_ref[...]
    o_ref[...] = (mult * jnp.tanh(x) + bias).astype(o_ref.dtype)


# ------------------------------ JAX wrapper ----------------------------------
def biased_tanh(x, mult=0.5, bias=0.5, *, max_block_rows=1024):
    """Pallas implementation of BiasedTanh.forward: mult * tanh(x) + bias.

    Works for any input rank; internally flattened to 2-D [rows, last_dim] so the
    last dim maps to lanes and rows are tiled over a 1-D grid (pipelined DMA,
    megacore-parallel on v7x).
    """
    orig_shape = x.shape
    if x.ndim == 0:
        x2 = x.reshape(1, 1)
    elif x.ndim == 1:
        x2 = x.reshape(1, -1)
    else:
        x2 = x.reshape(-1, orig_shape[-1])

    rows, cols = x2.shape

    # Row tile: multiple of 8 (sublane) when tiling, or the full extent when small.
    if rows > max_block_rows:
        tb = max_block_rows  # multiple of 8
    else:
        tb = rows            # full-extent block is always legal

    grid = (pl.cdiv(rows, tb),)

    out = pl.pallas_call(
        functools.partial(_biased_tanh_kernel, mult=mult, bias=bias),
        out_shape=jax.ShapeDtypeStruct((rows, cols), x2.dtype),
        grid=grid,
        in_specs=[pl.BlockSpec((tb, cols), lambda i: (i, 0))],
        out_specs=pl.BlockSpec((tb, cols), lambda i: (i, 0)),
        compiler_params=pltpu.CompilerParams(
            dimension_semantics=("parallel",),  # megacore sharding on v7x
        ),
    )(x2)

    return out.reshape(orig_shape)


# pure-JAX reference for a sanity check
def _reference_forward(x, mult=0.5, bias=0.5):
    return mult * jnp.tanh(x) + bias


if __name__ == "__main__":
    # Small shapes: batch of 32 rows, 256 features (lane-dense last dim).
    key = jax.random.PRNGKey(0)
    x = jax.random.normal(key, (32, 256), jnp.float32)

    fwd = jax.jit(biased_tanh)
    y = fwd(x)
    y = jax.block_until_ready(y)

    y_ref = _reference_forward(x)
    assert y.shape == x.shape, (y.shape, x.shape)
    assert jnp.allclose(y, y_ref, atol=1e-6, rtol=1e-6), float(
        jnp.max(jnp.abs(y - y_ref))
    )

    print("KERNEL_OK")
</pallas_src>

<mosaic_0001>
module attributes {stable_mosaic.version = 11 : i64} {
  func.func @_biased_tanh_kernel(%arg0: i32, %arg1: memref<32x256xf32, #tpu.memory_space<vmem>>, %arg2: memref<32x256xf32, #tpu.memory_space<vmem>>) attributes {dimension_semantics = [#tpu.dimension_semantics<parallel>], iteration_bounds = array<i64: 1>, scalar_prefetch = 0 : i64, scratch_operands = 0 : i64, tpu.core_type = #tpu.core_type<tc>, window_params = [{transform_indices = @transform_0, window_bounds = array<i64: 32, 256>}, {transform_indices = @transform_1, window_bounds = array<i64: 32, 256>}]} {
    %c0 = arith.constant 0 : index
    %c0_0 = arith.constant 0 : index
    %0 = vector.load %arg1[%c0, %c0_0] : memref<32x256xf32, #tpu.memory_space<vmem>>, vector<32x256xf32>
    %1 = math.tanh %0 : vector<32x256xf32>
    %cst = arith.constant 5.000000e-01 : f32
    %2 = vector.broadcast %cst : f32 to vector<32x256xf32>
    %3 = arith.mulf %2, %1 : vector<32x256xf32>
    %cst_1 = arith.constant 5.000000e-01 : f32
    %4 = vector.broadcast %cst_1 : f32 to vector<32x256xf32>
    %5 = arith.addf %3, %4 : vector<32x256xf32>
    %c0_2 = arith.constant 0 : index
    %c0_3 = arith.constant 0 : index
    %6 = vector.load %arg2[%c0_2, %c0_3] : memref<32x256xf32, #tpu.memory_space<vmem>>, vector<32x256xf32>
    tpu.vector_store %arg2[%c0_2, %c0_3], %5 {strides = array<i32>} : memref<32x256xf32, #tpu.memory_space<vmem>>, vector<32x256xf32>,
    return
  }
  func.func @transform_0(%arg0: i32) -> (i32, i32) {
    %c0_i32 = arith.constant 0 : i32
    %c0_i32_0 = arith.constant 0 : i32
    return %arg0, %c0_i32 : i32, i32
  }
  func.func @transform_1(%arg0: i32) -> (i32, i32) {
    %c0_i32 = arith.constant 0 : i32
    %c0_i32_0 = arith.constant 0 : i32
    return %arg0, %c0_i32 : i32, i32
  }
}

</mosaic_0001>

<llo_original>
// kernel: biased_tanh.1
$region0: #{biased_tanh.1}
  #allocation0 [shape = 'u32[]', space=smem, size = 0x4, offset = 0x4, fixed_abs, tag = 'smem constant byte address 0x4 - core index']
  #allocation1 [shape = 'u32[144,128]{1,0:T(1,128)}', space=vmem, size = 0x12000, scoped, tag = 'internal scratch']
  %s0 = inlined_call_operand.hbm [shape: f32[32,256], index: 0, kind: input, shape index: {}]
  %s1 = inlined_call_operand.hbm [shape: f32[32,256], index: 1, kind: output, shape index: {}]
  %s2 = sld [smem:[#allocation0]]
  $region18: #{biased_tanh.1} parent=0
    _
  %s4 = ssub.s32 1, %s2
  %s5 = scalar_select 0, %s4, %s2
  $region1: #{biased_tanh.1} parent=0
    #allocation2 [shape = 'u8[32768]{0}', space=vmem, size = 0x8000, scoped, tag = 'input window, operand 0, single buffered']
    #allocation3 [shape = 's32[1]{0}', space=sflag, size = 0x4, scoped, tag = 'scoped memory for biased_tanh.1']
    #allocation4 [shape = 's32[1]{0}', space=sflag, size = 0x4, scoped, tag = 'scoped memory for biased_tanh.1']
    #allocation5 [shape = 'u8[32768]{0}', space=vmem, size = 0x8000, scoped, tag = 'output window, operand 0, single buffered']
    %6 = vsyncpa [#allocation3], 0
    %7 = vsyncpa [#allocation4], 0
    // Predicated region
    $region2: #{biased_tanh.1} parent=1 // pred_check
      _
    $region3: #{biased_tanh.1} parent=1 // pred_check_branch
      %9 = sbr.rel (0) target = $region5
    $region4: #{biased_tanh.1} parent=1 // pred_region
      %s11 = ssub.s32 1024, 1024
      %12 = vsyncadd [#allocation3], %s11
      %s13 = sshll.u32 [#allocation2], 4
      %s14 = int_to_ptr.vmem [resolvable:$true] %s13
      %19 = dma.hbm_to_vmem [thread:$0]  %s0, 1024, %s14, [#allocation3], 256, 256, 16
    $region5: #{biased_tanh.1} parent=1 // pred_fallthru
      _
    // Predicated region
    $region6: #{biased_tanh.1} parent=1 // pred_check
      _
    $region7: #{biased_tanh.1} parent=1 // pred_check_branch
      %21 = sbr.rel (0) target = $region9
    $region8: #{biased_tanh.1} parent=1 // pred_region
      %22 = dma.done [#allocation3], 1024
    $region9: #{biased_tanh.1} parent=1 // pred_fallthru
      _
    %v23 = vld [vmem:[#allocation2] sm:$0xff]
    %v24 = vld [vmem:[#allocation2 + $0x8] sm:$0xff]
    %v25 = vld [vmem:[#allocation2 + $0x10] sm:$0xff]
    %v26 = vld [vmem:[#allocation2 + $0x18] sm:$0xff]
    %v27 = vld [vmem:[#allocation2 + $0x20] sm:$0xff]
    %v28 = vld [vmem:[#allocation2 + $0x28] sm:$0xff]
    %v29 = vld [vmem:[#allocation2 + $0x30] sm:$0xff]
    %v30 = vld [vmem:[#allocation2 + $0x38] sm:$0xff]
    %v31 = vtanh.pop %v23
    %v32 = vtanh.pop %v24
    %v33 = vtanh.pop %v25
    %v34 = vtanh.pop %v26
    %v35 = vtanh.pop %v27
    %v36 = vtanh.pop %v28
    %v37 = vtanh.pop %v29
    %v38 = vtanh.pop %v30
    %v39 = vmul.f32 %v31, 0.5
    %v40 = vmul.f32 %v32, 0.5
    %v41 = vmul.f32 %v33, 0.5
    %v42 = vmul.f32 %v34, 0.5
    %v43 = vmul.f32 %v35, 0.5
    %v44 = vmul.f32 %v36, 0.5
    %v45 = vmul.f32 %v37, 0.5
    %v46 = vmul.f32 %v38, 0.5
    %v47 = vadd.f32 %v39, 0.5
    %v48 = vadd.f32 %v40, 0.5
    %v49 = vadd.f32 %v41, 0.5
    %v50 = vadd.f32 %v42, 0.5
    %v51 = vadd.f32 %v43, 0.5
    %v52 = vadd.f32 %v44, 0.5
    %v53 = vadd.f32 %v45, 0.5
    %v54 = vadd.f32 %v46, 0.5
    %55 = vst [vmem:[#allocation5] sm:$0xff] %v47
    %56 = vst [vmem:[#allocation5 + $0x8] sm:$0xff] %v48
    %57 = vst [vmem:[#allocation5 + $0x10] sm:$0xff] %v49
    %58 = vst [vmem:[#allocation5 + $0x18] sm:$0xff] %v50
    %59 = vst [vmem:[#allocation5 + $0x20] sm:$0xff] %v51
    %60 = vst [vmem:[#allocation5 + $0x28] sm:$0xff] %v52
    %61 = vst [vmem:[#allocation5 + $0x30] sm:$0xff] %v53
    %62 = vst [vmem:[#allocation5 + $0x38] sm:$0xff] %v54
    // Predicated region
    $region10: #{biased_tanh.1} parent=1 // pred_check
      _
    $region11: #{biased_tanh.1} parent=1 // pred_check_branch
      %64 = sbr.rel (0) target = $region13
    $region12: #{biased_tanh.1} parent=1 // pred_region
      %s66 = ssub.s32 1024, 1024
      %67 = vsyncadd [#allocation4], %s66
      %s68 = sshll.u32 [#allocation5], 4
      %s69 = int_to_ptr.vmem [resolvable:$true] %s68
      %74 = dma.vmem_to_hbm [thread:$0]  %s69, 1024, %s1, [#allocation4], 256, 256, 16
    $region13: #{biased_tanh.1} parent=1 // pred_fallthru
      _
    // Predicated region
    $region14: #{biased_tanh.1} parent=1 // pred_check
      _
    $region15: #{biased_tanh.1} parent=1 // pred_check_branch
      %76 = sbr.rel (0) target = $region17
    $region16: #{biased_tanh.1} parent=1 // pred_region
      %77 = dma.done [#allocation4], 1024
    $region17: #{biased_tanh.1} parent=1 // pred_fallthru
      _
    %78 = vsyncpa [#allocation3], 1
    %79 = vsyncpa [#allocation4], 1

</llo_original>
